<compile_context>
chip_gen: v5e
topology: v5e:2x2
jax: 0.10.0
libtpu: 0.0.40
codegen_flags: <defaults>
</compile_context>

<pallas_src>
import jax
import jax.numpy as jnp
from jax.experimental import pallas as pl
from jax.experimental.pallas import tpu as pltpu


def _attention_body(x_ref, w_ref, b_ref, o_ref, m_ref=None):
    """Compute attention for one batch tile.

    x_ref: (Bt, S, F) input tile (storage dtype)
    w_ref: (1, F)     weight row (lane-dense)
    b_ref: (1, S)     bias row
    m_ref: (Bt, S)    optional mask tile
    o_ref: (Bt, F)    output tile
    """
    x = x_ref[...]                                  # keep storage dtype
    w = w_ref[...].astype(jnp.float32)              # (1, F)
    b = b_ref[...].astype(jnp.float32)              # (1, S)

    # e[n, s] = sum_f x[n, s, f] * w[f]  -- VPU multiply + lane reduce
    # (the matmul has a degenerate N=1 dim, so MXU would be ~0% utilized).
    e = jnp.sum(x * w[None, :, :], axis=-1)         # (Bt, S), f32 accumulate
    e = jnp.tanh(e + b)                             # bias broadcast over batch
    a = jnp.exp(e)                                  # (Bt, S)
    if m_ref is not None:
        a = a * m_ref[...].astype(jnp.float32)

    denom = jnp.sum(a, axis=-1, keepdims=True)      # (Bt, 1)
    inv = pl.reciprocal(denom, approx=True)         # EUP slot (cheap)
    inv = inv * (2.0 - denom * inv)                 # one Newton step -> ~f32 exact
    a = a * inv + 1e-10                             # eps after normalize (as torch)

    # out[n, f] = sum_s a[n, s] * x[n, s, f] -- VPU multiply + sublane reduce
    # (degenerate M=1 matmul otherwise).
    out = jnp.sum(a[..., None] * x, axis=1)         # (Bt, F), f32
    o_ref[...] = out.astype(o_ref.dtype)


def _kernel_nomask(x_ref, w_ref, b_ref, o_ref):
    _attention_body(x_ref, w_ref, b_ref, o_ref)


def _kernel_mask(x_ref, w_ref, b_ref, m_ref, o_ref):
    _attention_body(x_ref, w_ref, b_ref, o_ref, m_ref)


def attention_pallas(x, weight, bias, mask=None, *, block_b=None,
                     target_tile_bytes=4 * 1024 * 1024,
                     vmem_limit_bytes=None):
    """x: (B, S, F), weight: (F, 1), bias: (S,), mask: optional (B, S) -> (B, F)."""
    B, S, F = x.shape
    itemsize = jnp.dtype(x.dtype).itemsize

    # --- batch-tile sizing: many rows per grid step (kernel is HBM-bound) ---
    if block_b is None:
        bt = max(1, int(target_tile_bytes) // (S * F * itemsize))
        if bt >= B:
            bt = B                        # one tile covers the whole batch
        else:
            bt = max(8, (bt // 8) * 8)    # sublane-aligned output tiles
    else:
        bt = int(block_b)
    num_tiles = (B + bt - 1) // bt
    b_pad = num_tiles * bt

    if b_pad != B:
        x = jnp.pad(x, ((0, b_pad - B), (0, 0), (0, 0)))
        if mask is not None:
            mask = jnp.pad(mask, ((0, b_pad - B), (0, 0)), constant_values=1.0)

    w_row = weight.reshape(1, F).astype(jnp.float32)   # lane-dense weight
    b_row = bias.reshape(1, S).astype(jnp.float32)

    in_specs = [
        pl.BlockSpec((bt, S, F), lambda i: (i, 0, 0)),  # batch tile of x
        pl.BlockSpec((1, F), lambda i: (0, 0)),         # weight (resident)
        pl.BlockSpec((1, S), lambda i: (0, 0)),         # bias (resident)
    ]
    args = [x, w_row, b_row]
    kernel = _kernel_nomask
    if mask is not None:
        in_specs.append(pl.BlockSpec((bt, S), lambda i: (i, 0)))
        args.append(mask)
        kernel = _kernel_mask

    out = pl.pallas_call(
        kernel,
        out_shape=jax.ShapeDtypeStruct((b_pad, F), x.dtype),
        grid_spec=pltpu.PrefetchScalarGridSpec(
            num_scalar_prefetch=0,
            grid=(num_tiles,),
            in_specs=in_specs,
            out_specs=pl.BlockSpec((bt, F), lambda i: (i, 0)),
        ),
        compiler_params=pltpu.CompilerParams(
            dimension_semantics=("parallel",),
            vmem_limit_bytes=vmem_limit_bytes,
        ),
    )(*args)

    return out[:B] if b_pad != B else out


def attention_ref(x, weight, bias, mask=None):
    """Pure-JAX reference mirroring the PyTorch forward."""
    B, S, F = x.shape
    eij = (x.reshape(-1, F) @ weight).reshape(B, S)
    eij = jnp.tanh(eij + bias)
    a = jnp.exp(eij)
    if mask is not None:
        a = a * mask
    a = a / jnp.sum(a, axis=1, keepdims=True) + 1e-10
    return jnp.sum(x * a[..., None], axis=1)


if __name__ == "__main__":
    B, S, F = 2, 8, 32   # batch, step_num, feature_dim

    key = jax.random.PRNGKey(0)
    kx, kw, kb, km = jax.random.split(key, 4)

    x = jax.random.normal(kx, (B, S, F), dtype=jnp.float32)

    # xavier_uniform_ on (feature_dim, 1): bound = sqrt(6 / (F + 1))
    bound = (6.0 / (F + 1)) ** 0.5
    weight = jax.random.uniform(kw, (F, 1), minval=-bound, maxval=bound,
                                dtype=jnp.float32)
    # module inits b to zeros; use a small deterministic perturbation so the
    # bias-add path is actually exercised
    bias = 0.1 * jax.random.normal(kb, (S,), dtype=jnp.float32)

    # default path (mask=None)
    out = jax.block_until_ready(attention_pallas(x, weight, bias))
    ref = attention_ref(x, weight, bias)
    assert out.shape == (B, F)
    assert jnp.allclose(out, ref, atol=1e-4, rtol=1e-4), "mismatch (no mask)"

    # masked path
    mask = (jax.random.uniform(km, (B, S)) > 0.3).astype(jnp.float32)
    mask = mask.at[:, 0].set(1.0)   # ensure no all-zero row
    out_m = jax.block_until_ready(attention_pallas(x, weight, bias, mask=mask))
    ref_m = attention_ref(x, weight, bias, mask=mask)
    assert jnp.allclose(out_m, ref_m, atol=1e-4, rtol=1e-4), "mismatch (masked)"

    print("KERNEL_OK")
</pallas_src>

<mosaic_0001>
module attributes {stable_mosaic.version = 11 : i64} {
  func.func @_kernel_nomask(%arg0: i32, %arg1: memref<2x8x32xf32, #tpu.memory_space<vmem>>, %arg2: memref<1x32xf32, #tpu.memory_space<vmem>>, %arg3: memref<1x8xf32, #tpu.memory_space<vmem>>, %arg4: memref<2x32xf32, #tpu.memory_space<vmem>>) attributes {dimension_semantics = [#tpu.dimension_semantics<parallel>], iteration_bounds = array<i64: 1>, scalar_prefetch = 0 : i64, scratch_operands = 0 : i64, tpu.core_type = #tpu.core_type<tc>, window_params = [{transform_indices = @transform_0, window_bounds = array<i64: 2, 8, 32>}, {pipeline_mode = #tpu.pipeline_mode<synchronous>, transform_indices = @transform_1, window_bounds = array<i64: 1, 32>}, {pipeline_mode = #tpu.pipeline_mode<synchronous>, transform_indices = @transform_2, window_bounds = array<i64: 1, 8>}, {transform_indices = @transform_3, window_bounds = array<i64: 2, 32>}]} {
    %c0 = arith.constant 0 : index
    %c0_0 = arith.constant 0 : index
    %c0_1 = arith.constant 0 : index
    %0 = vector.load %arg1[%c0, %c0_0, %c0_1] : memref<2x8x32xf32, #tpu.memory_space<vmem>>, vector<2x8x32xf32>
    %c0_2 = arith.constant 0 : index
    %c0_3 = arith.constant 0 : index
    %1 = vector.load %arg2[%c0_2, %c0_3] : memref<1x32xf32, #tpu.memory_space<vmem>>, vector<1x32xf32>
    %c0_4 = arith.constant 0 : index
    %c0_5 = arith.constant 0 : index
    %2 = vector.load %arg3[%c0_4, %c0_5] : memref<1x8xf32, #tpu.memory_space<vmem>>, vector<1x8xf32>
    %3 = vector.shape_cast %1 : vector<1x32xf32> to vector<1x1x32xf32>
    %4 = vector.broadcast %3 : vector<1x1x32xf32> to vector<2x8x32xf32>
    %5 = arith.mulf %0, %4 : vector<2x8x32xf32>
    %cst = arith.constant dense<0.000000e+00> : vector<2x8xf32>
    %6 = vector.multi_reduction <add>, %5, %cst [2] : vector<2x8x32xf32> to vector<2x8xf32>
    %7 = vector.broadcast %2 : vector<1x8xf32> to vector<2x8xf32>
    %8 = arith.addf %6, %7 : vector<2x8xf32>
    %9 = math.tanh %8 : vector<2x8xf32>
    %10 = math.exp %9 : vector<2x8xf32>
    %cst_6 = arith.constant dense<0.000000e+00> : vector<2xf32>
    %11 = vector.multi_reduction <add>, %10, %cst_6 [1] : vector<2x8xf32> to vector<2xf32>
    %12 = vector.shape_cast %11 : vector<2xf32> to vector<2x1xf32>
    %13 = tpu.reciprocal %12 {approx = true} : vector<2x1xf32> -> vector<2x1xf32>
    %14 = arith.mulf %12, %13 : vector<2x1xf32>
    %cst_7 = arith.constant 2.000000e+00 : f32
    %15 = vector.broadcast %cst_7 : f32 to vector<2x1xf32>
    %16 = arith.subf %15, %14 : vector<2x1xf32>
    %17 = arith.mulf %13, %16 : vector<2x1xf32>
    %18 = vector.broadcast %17 : vector<2x1xf32> to vector<2x8xf32>
    %19 = arith.mulf %10, %18 : vector<2x8xf32>
    %cst_8 = arith.constant 1.000000e-10 : f32
    %20 = vector.broadcast %cst_8 : f32 to vector<2x8xf32>
    %21 = arith.addf %19, %20 : vector<2x8xf32>
    %22 = vector.shape_cast %21 : vector<2x8xf32> to vector<2x8x1xf32>
    %23 = vector.broadcast %22 : vector<2x8x1xf32> to vector<2x8x32xf32>
    %24 = arith.mulf %23, %0 : vector<2x8x32xf32>
    %cst_9 = arith.constant dense<0.000000e+00> : vector<2x32xf32>
    %25 = vector.multi_reduction <add>, %24, %cst_9 [1] : vector<2x8x32xf32> to vector<2x32xf32>
    %c0_10 = arith.constant 0 : index
    %c0_11 = arith.constant 0 : index
    %26 = vector.load %arg4[%c0_10, %c0_11] : memref<2x32xf32, #tpu.memory_space<vmem>>, vector<2x32xf32>
    tpu.vector_store %arg4[%c0_10, %c0_11], %25 {strides = array<i32>} : memref<2x32xf32, #tpu.memory_space<vmem>>, vector<2x32xf32>,
    return
  }
  func.func @transform_0(%arg0: i32) -> (i32, i32, i32) {
    %c0_i32 = arith.constant 0 : i32
    %c0_i32_0 = arith.constant 0 : i32
    %c0_i32_1 = arith.constant 0 : i32
    return %arg0, %c0_i32, %c0_i32_0 : i32, i32, i32
  }
  func.func @transform_1(%arg0: i32) -> (i32, i32) {
    %c0_i32 = arith.constant 0 : i32
    %c0_i32_0 = arith.constant 0 : i32
    %c0_i32_1 = arith.constant 0 : i32
    return %c0_i32, %c0_i32_0 : i32, i32
  }
  func.func @transform_2(%arg0: i32) -> (i32, i32) {
    %c0_i32 = arith.constant 0 : i32
    %c0_i32_0 = arith.constant 0 : i32
    %c0_i32_1 = arith.constant 0 : i32
    return %c0_i32, %c0_i32_0 : i32, i32
  }
  func.func @transform_3(%arg0: i32) -> (i32, i32) {
    %c0_i32 = arith.constant 0 : i32
    %c0_i32_0 = arith.constant 0 : i32
    return %arg0, %c0_i32 : i32, i32
  }
}

</mosaic_0001>

<llo_original>
// kernel: tpu_custom_call.1
$region0: #{tpu_custom_call.1}
  #allocation0 [shape = 'u32[]', space=smem, size = 0x4, offset = 0x4, fixed_abs, tag = 'smem constant byte address 0x4 - core index']
  #allocation1 [shape = 'u32[72,128]{1,0:T(1,128)}', space=vmem, size = 0x9000, scoped, tag = 'internal scratch']
  %s0 = inlined_call_operand.hbm [shape: f32[2,8,32], index: 0, kind: input, shape index: {}]
  %s1 = inlined_call_operand.hbm [shape: f32[1,32], index: 1, kind: input, shape index: {}]
  %s2 = inlined_call_operand.vmem [shape: f32[1,8], index: 2, kind: input, shape index: {}]
  %s3 = inlined_call_operand.hbm [shape: f32[2,32], index: 3, kind: output, shape index: {}]
  %s4 = sld [smem:[#allocation0]]
  $region30: #{tpu_custom_call.1} parent=0
    _
  %s6 = ssub.s32 1, %s4
  %s7 = scalar_select 0, %s6, %s4
  $region1: #{tpu_custom_call.1} parent=0
    #allocation2 [shape = 'u8[8192]{0}', space=vmem, size = 0x2000, scoped, tag = 'input window, operand 0, single buffered']
    #allocation3 [shape = 's32[1]{0}', space=sflag, size = 0x4, scoped, tag = 'scoped memory for tpu_custom_call.1']
    #allocation4 [shape = 's32[1]{0}', space=sflag, size = 0x4, scoped, tag = 'scoped memory for tpu_custom_call.1']
    #allocation5 [shape = 'u8[512]{0}', space=vmem, size = 0x400, scoped, tag = 'input window, operand 1, single buffered']
    #allocation6 [shape = 's32[1]{0}', space=sflag, size = 0x4, scoped, tag = 'scoped memory for tpu_custom_call.1']
    #allocation7 [shape = 'u8[1024]{0}', space=vmem, size = 0x400, scoped, tag = 'output window, operand 0, single buffered']
    %8 = vsyncpa [#allocation3], 0
    %9 = vsyncpa [#allocation6], 0
    %10 = vsyncpa [#allocation4], 0
    // Predicated region
    $region2: #{tpu_custom_call.1} parent=1 // pred_check
      _
    $region3: #{tpu_custom_call.1} parent=1 // pred_check_branch
      %12 = sbr.rel (0) target = $region5
    $region4: #{tpu_custom_call.1} parent=1 // pred_region
      %14 = vsyncadd [#allocation3], 0
      %s15 = sshll.u32 %s0, 4
      %s16 = int_to_ptr.hbm [resolvable:$true] %s15
      %s17 = sshll.u32 [#allocation2], 4
      %s18 = int_to_ptr.vmem [resolvable:$true] %s17
      %23 = dma.hbm_to_vmem [thread:$0]  %s16, 256, %s18, [#allocation3], 128, 128, 8
    $region5: #{tpu_custom_call.1} parent=1 // pred_fallthru
      _
    // Predicated region
    $region6: #{tpu_custom_call.1} parent=1 // pred_check
      _
    $region7: #{tpu_custom_call.1} parent=1 // pred_check_branch
      %25 = sbr.rel (0) target = $region9
    $region8: #{tpu_custom_call.1} parent=1 // pred_region
      %27 = vsyncadd [#allocation6], 0
      %s29 = sshll.u32 %s1, 4
      %s30 = int_to_ptr.hbm [resolvable:$true] %s29
      %s31 = sshll.u32 [#allocation5], 4
      %s32 = int_to_ptr.vmem [resolvable:$true] %s31
      %34 = dma.hbm_to_vmem [thread:$0]  %s30, 16, %s32, [#allocation6]
    $region9: #{tpu_custom_call.1} parent=1 // pred_fallthru
      _
    // Predicated region
    $region10: #{tpu_custom_call.1} parent=1 // pred_check
      _
    $region11: #{tpu_custom_call.1} parent=1 // pred_check_branch
      %36 = sbr.rel (0) target = $region13
    $region12: #{tpu_custom_call.1} parent=1 // pred_region
      _
    $region13: #{tpu_custom_call.1} parent=1 // pred_fallthru
      _
    // Predicated region
    $region14: #{tpu_custom_call.1} parent=1 // pred_check
      _
    $region15: #{tpu_custom_call.1} parent=1 // pred_check_branch
      %38 = sbr.rel (0) target = $region17
    $region16: #{tpu_custom_call.1} parent=1 // pred_region
      %40 = dma.done [#allocation3], 256
    $region17: #{tpu_custom_call.1} parent=1 // pred_fallthru
      _
    // Predicated region
    $region18: #{tpu_custom_call.1} parent=1 // pred_check
      _
    $region19: #{tpu_custom_call.1} parent=1 // pred_check_branch
      %42 = sbr.rel (0) target = $region21
    $region20: #{tpu_custom_call.1} parent=1 // pred_region
      %44 = dma.done [#allocation6], 16
    $region21: #{tpu_custom_call.1} parent=1 // pred_fallthru
      _
    %v45 = vld [vmem:[#allocation2] sm:$0xff]
    %v46 = vld [vmem:[#allocation2 + $0x8] sm:$0xff]
    %v47 = vld [vmem:[#allocation5] sm:$0x1]
    %v48 = vld [vmem:[%s2] sm:$0x1]
    %v50 = vperm.slane %v47, 0
    %v52 = vmul.f32 %v45, %v50
    %v53 = vmul.f32 %v46, %v50
    %vm54 = vcmask 261120
    %v55 = vsel %vm54, %v52, 0.0
    %56 = vadd.xlane.f32.xlu0 %v55
    %v57 = vpop.xlane.xlu0 %56
    %v58 = vsel %vm54, %v53, 0.0
    %59 = vadd.xlane.f32.xlu0 %v58
    %v60 = vpop.xlane.xlu0 %59
    %v62 = vperm.slane %v48, 0
    %v63 = vlaneseq
    %v64 = vshrl.u32 %v63, 7
    %66 = vset.pattern.permute.xlu0 %v64
    %67 = vperm.xlu0 %66, %v62
    %v68 = vpop.permute.xlu0 %67
    %v70 = vadd.f32 %v57, %v68
    %v71 = vadd.f32 %v60, %v68
    %v72 = vtanh.pop %v70
    %v73 = vtanh.pop %v71
    %v74 = vmul.f32 %v72, 1.442695
    %v75 = vpow.pop %v74
    %v76 = vmul.f32 %v73, 1.442695
    %v77 = vpow.pop %v76
    %80 = vset.pattern.permute.xlu0 0
    %81 = vperm.xlu0 %80, %v75
    %v82 = vpop.permute.xlu0 %81
    %83 = vset.pattern.permute.xlu0 0
    %84 = vperm.xlu0 %83, %v77
    %v85 = vpop.permute.xlu0 %84
    %v86 = vlaneseq
    %v87 = vand.u32 %v86, 127
    %v88 = vperm.slane %v82, %v87
    %v89 = vperm.slane %v85, %v87
    %vm90 = vcmask 1041409
    %v91 = vsel %vm90, %v89, %v88
    %vm93 = vcmask 58368
    %v94 = vsel %vm93, %v91, 0.0
    %95 = vadd.xlane.f32.xlu0 %v94
    %v96 = vpop.xlane.xlu0 %95
    %v97 = vrcp.pop %v96
    %v98 = vmul.f32 %v96, %v97
    %v99 = vsub.f32 2.0, %v98
    %v100 = vmul.f32 %v97, %v99
    %v102 = vperm.slane %v100, 0
    %v103 = vperm.slane %v100, 1
    %v106 = vmul.f32 %v75, %v102
    %v107 = vmul.f32 %v77, %v103
    %v108 = vadd.f32 %v106, 1e-10
    %v109 = vadd.f32 %v107, 1e-10
    %111 = vset.pattern.permute.xlu0 0
    %112 = vperm.xlu0 %111, %v108
    %v113 = vpop.permute.xlu0 %112
    %116 = vset.pattern.permute.xlu0 0
    %117 = vperm.xlu0 %116, %v109
    %v118 = vpop.permute.xlu0 %117
    %v120 = vmul.f32 %v113, %v45
    %v121 = vmul.f32 %v118, %v46
    %v122 = vsel %vm54, %v120, 0.0
    %v123 = vrot.slane %v122, 4
    %v124 = vadd.f32 %v122, %v123
    %v125 = vrot.slane %v124, 2
    %v126 = vadd.f32 %v124, %v125
    %v127 = vrot.slane %v126, 1
    %v128 = vadd.f32 %v126, %v127
    %v129 = vsel %vm54, %v121, 0.0
    %v130 = vrot.slane %v129, 4
    %v131 = vadd.f32 %v129, %v130
    %v132 = vrot.slane %v131, 2
    %v133 = vadd.f32 %v131, %v132
    %v134 = vrot.slane %v133, 1
    %v135 = vadd.f32 %v133, %v134
    %v138 = vsel %vm90, %v135, %v128
    %vm140 = vcmask 254976
    %141 = vst.msk [vmem:[#allocation7] sm:$0x3] %vm140, %v138
    // Predicated region
    $region22: #{tpu_custom_call.1} parent=1 // pred_check
      _
    $region23: #{tpu_custom_call.1} parent=1 // pred_check_branch
      %143 = sbr.rel (0) target = $region25
    $region24: #{tpu_custom_call.1} parent=1 // pred_region
      %145 = vsyncadd [#allocation4], 0
      %s147 = sshll.u32 [#allocation7], 4
      %s148 = int_to_ptr.vmem [resolvable:$true] %s147
      %s149 = sshll.u32 %s3, 4
      %s150 = int_to_ptr.hbm [resolvable:$true] %s149
      %152 = dma.vmem_to_hbm [thread:$0]  %s148, 32, %s150, [#allocation4]
    $region25: #{tpu_custom_call.1} parent=1 // pred_fallthru
      _
    // Predicated region
    $region26: #{tpu_custom_call.1} parent=1 // pred_check
      _
    $region27: #{tpu_custom_call.1} parent=1 // pred_check_branch
      %154 = sbr.rel (0) target = $region29
    $region28: #{tpu_custom_call.1} parent=1 // pred_region
      %156 = dma.done [#allocation4], 32
    $region29: #{tpu_custom_call.1} parent=1 // pred_fallthru
      _
    %157 = vsyncpa [#allocation3], 1
    %158 = vsyncpa [#allocation6], 1
    %159 = vsyncpa [#allocation4], 1

</llo_original>
